<compile_context>
chip_gen: v6e
topology: v6e:2x2x1
jax: 0.10.0
libtpu: 0.0.40
codegen_flags: <defaults>
</compile_context>

<pallas_src>
import functools

import jax
import jax.numpy as jnp
from jax.experimental import pallas as pl
from jax.experimental.pallas import tpu as pltpu


def _round_up(x, m):
    return (x + m - 1) // m * m


def _vmem_budget_bytes():
    """Per-generation VMEM budget, leaving ~25% headroom for compiler scratch."""
    try:
        cap = int(pltpu.get_tpu_info().vmem_capacity_bytes)
    except Exception:  # no TPU visible (e.g. interpret/CPU fallback)
        cap = 64 * 1024 * 1024           # conservative: v7x per-core VMEM
    return int(cap * 3 // 4)             # ~96 MiB on v5e/v6e, ~48 MiB on v7x


def _plan_tiles(B, d_in, d_out, budget_bytes, with_mask):
    """Pick (TM, TN, TK).  Prefer full-K residency; shrink TK -> TN -> TM."""
    TM = min(512, _round_up(B, 8))
    TN = min(512, _round_up(d_out, 128))
    full_k = _round_up(d_in, 128)
    TK = full_k

    def vmem_bytes(tm, tn, tk):
        ktiled = tk < full_k
        elems = 2 * tm * tk + 2 * tk * tn + 2 * tn + 2 * tm * tn  # dbl-buffered tiles
        if with_mask:
            elems += 2 * tm * tn
        if ktiled:
            elems += tm * tn                                      # f32 accumulator
        return 4 * elems                                          # f32 streaming

    while vmem_bytes(TM, TN, TK) > budget_bytes and TK > 512:
        TK = max(512, _round_up(TK // 2, 128))
    while vmem_bytes(TM, TN, TK) > budget_bytes and TN > 128:
        TN = max(128, _round_up(TN // 2, 128))
    while vmem_bytes(TM, TN, TK) > budget_bytes and TM > 128:
        TM = max(128, _round_up(TM // 2, 8))
    while vmem_bytes(TM, TN, TK) > budget_bytes and TK > 256:
        TK = max(256, _round_up(TK // 2, 128))
    return TM, TN, TK


def _fc_kernel_full_k(x_ref, w_ref, b_ref, *rest, apply_relu, use_dropout):
    """2-D grid (no K axis): one full-K dot straight into the output tile."""
    if use_dropout:
        mask_ref, o_ref = rest
    else:
        (o_ref,) = rest
    y = jnp.dot(x_ref[...], w_ref[...], preferred_element_type=jnp.float32)
    y = y + b_ref[...]                       # (TM,TN) + (1,TN)
    if apply_relu:
        y = jnp.maximum(y, 0.0)
    if use_dropout:
        y = y * mask_ref[...]                # pre-scaled {0, 1/(1-p)} mask
    o_ref[...] = y.astype(o_ref.dtype)


def _fc_kernel_ktiled(x_ref, w_ref, b_ref, *rest, apply_relu, use_dropout):
    """3-D grid (N, M, K), K innermost reduction with f32 VMEM accumulator."""
    if use_dropout:
        mask_ref, o_ref, acc_ref = rest
    else:
        o_ref, acc_ref = rest
    k = pl.program_id(2)

    @pl.when(k == 0)
    def _():
        acc_ref[...] = jnp.zeros_like(acc_ref)

    acc_ref[...] += jnp.dot(x_ref[...], w_ref[...],
                            preferred_element_type=jnp.float32)

    @pl.when(k == pl.num_programs(2) - 1)
    def _():
        y = acc_ref[...] + b_ref[...]
        if apply_relu:
            y = jnp.maximum(y, 0.0)
        if use_dropout:
            y = y * mask_ref[...]
        o_ref[...] = y.astype(o_ref.dtype)


def fully_connected_block(x, weight, bias, *, raw, dropout_p=0.0,
                          training=False, seed=0):
    """x: (B, d_in); weight: (d_out, d_in) [PyTorch layout]; bias: (d_out,)."""
    B, d_in = x.shape
    d_out, d_in_w = weight.shape
    assert d_in_w == d_in

    apply_relu = not raw
    use_dropout = apply_relu and training and float(dropout_p) > 0.0

    budget = _vmem_budget_bytes()
    TM, TN, TK = _plan_tiles(B, d_in, d_out, budget, use_dropout)
    Bp = _round_up(B, TM)
    Np = _round_up(d_out, TN)
    Kp = _round_up(d_in, TK)
    full_k = (Kp == TK)

    # One-time weight transpose to (d_in, d_out): plain row-major contraction,
    # no in-kernel transpose of the RHS tile.
    wt = weight.T
    xp = x if (Bp == B and Kp == d_in) else jnp.pad(x, ((0, Bp - B), (0, Kp - d_in)))
    wp = wt if (Kp == d_in and Np == d_out) else jnp.pad(
        wt, ((0, Kp - d_in), (0, Np - d_out)))
    bp = (bias if Np == d_out else jnp.pad(bias, (0, Np - d_out))).reshape(1, Np)

    args = [xp, wp, bp]
    if use_dropout:
        # Inverted dropout: pre-scaled multiplier computed outside the kernel.
        keep = jax.random.bernoulli(jax.random.PRNGKey(int(seed)),
                                    1.0 - float(dropout_p), (Bp, Np))
        scale = jnp.asarray(1.0 / (1.0 - float(dropout_p)), x.dtype)
        args.append(keep.astype(x.dtype) * scale)

    n_blocks = Np // TN
    m_blocks = Bp // TM
    flops = 2 * Bp * Kp * Np

    if full_k:
        # ---- 2-D grid, no K axis, no accumulator scratch --------------------
        extra_n_outer = Bp * Kp * (n_blocks - 1) if m_blocks > 1 else 0
        extra_m_outer = Kp * Np * (m_blocks - 1) if n_blocks > 1 else 0
        if extra_n_outer != extra_m_outer:
            n_outer = extra_n_outer < extra_m_outer
        else:
            n_outer = n_blocks >= m_blocks   # larger parallel axis outermost

        if n_outer:                          # grid = (n, m): weight tile resident
            grid = (n_blocks, m_blocks)
            x_map = lambda n, m: (m, 0)
            w_map = lambda n, m: (0, n)
            b_map = lambda n, m: (0, n)
            o_map = lambda n, m: (m, n)
            x_stream, w_stream = Bp * Kp + extra_n_outer, Kp * Np
        else:                                # grid = (m, n): x tile resident
            grid = (m_blocks, n_blocks)
            x_map = lambda m, n: (m, 0)
            w_map = lambda m, n: (0, n)
            b_map = lambda m, n: (0, n)
            o_map = lambda m, n: (m, n)
            x_stream, w_stream = Bp * Kp, Kp * Np + extra_m_outer

        in_specs = [pl.BlockSpec((TM, TK), x_map),
                    pl.BlockSpec((TK, TN), w_map),
                    pl.BlockSpec((1, TN), b_map)]
        if use_dropout:
            in_specs.append(pl.BlockSpec((TM, TN), o_map))
        out_specs = pl.BlockSpec((TM, TN), o_map)
        kernel = functools.partial(_fc_kernel_full_k,
                                   apply_relu=apply_relu, use_dropout=use_dropout)
        scratch_shapes = []
        dim_sem = ("parallel", "parallel")
    else:
        # ---- 3-D grid (N, M, K) with f32 VMEM accumulator -------------------
        grid = (n_blocks, m_blocks, Kp // TK)
        in_specs = [pl.BlockSpec((TM, TK), lambda n, m, k: (m, k)),
                    pl.BlockSpec((TK, TN), lambda n, m, k: (k, n)),
                    pl.BlockSpec((1, TN), lambda n, m, k: (0, n))]
        if use_dropout:
            in_specs.append(pl.BlockSpec((TM, TN), lambda n, m, k: (m, n)))
        out_specs = pl.BlockSpec((TM, TN), lambda n, m, k: (m, n))
        kernel = functools.partial(_fc_kernel_ktiled,
                                   apply_relu=apply_relu, use_dropout=use_dropout)
        scratch_shapes = [pltpu.VMEM((TM, TN), jnp.float32)]
        dim_sem = ("parallel", "parallel", "arbitrary")
        x_stream, w_stream = Bp * Kp * n_blocks, Kp * Np * m_blocks

    bytes_accessed = 4 * (x_stream + w_stream + Np
                          + Bp * Np * (2 if use_dropout else 1))
    cost = pl.CostEstimate(flops=flops, transcendentals=0,
                           bytes_accessed=bytes_accessed)

    out_padded = pl.pallas_call(
        kernel,
        out_shape=jax.ShapeDtypeStruct((Bp, Np), x.dtype),
        grid_spec=pltpu.PrefetchScalarGridSpec(
            num_scalar_prefetch=0,
            grid=grid,
            in_specs=in_specs,
            out_specs=out_specs,
            scratch_shapes=scratch_shapes,
        ),
        compiler_params=pltpu.CompilerParams(
            dimension_semantics=dim_sem,
            vmem_limit_bytes=int(budget),
        ),
        cost_estimate=cost,
    )(*args)

    return out_padded[:B, :d_out]


if __name__ == "__main__":
    key = jax.random.PRNGKey(0)
    kx, kw, kb = jax.random.split(key, 3)

    B, d_in, d_out = 8, 32, 64
    x = jax.random.normal(kx, (B, d_in), dtype=jnp.float32)
    bound = 1.0 / (d_in ** 0.5)
    weight = jax.random.uniform(kw, (d_out, d_in), jnp.float32, -bound, bound)
    bias = jax.random.uniform(kb, (d_out,), jnp.float32, -bound, bound)

    ref_raw = x @ weight.T + bias
    ref_relu = jnp.maximum(ref_raw, 0.0)

    # Config 1: raw=True -> pure Linear
    y_raw = fully_connected_block(x, weight, bias, raw=True)
    jax.block_until_ready(y_raw)
    assert jnp.allclose(y_raw, ref_raw, atol=1e-5, rtol=1e-5)

    # Config 2: raw=False, dropout=0 -> Linear + ReLU
    y_relu = fully_connected_block(x, weight, bias, raw=False, dropout_p=0.0)
    jax.block_until_ready(y_relu)
    assert jnp.allclose(y_relu, ref_relu, atol=1e-5, rtol=1e-5)

    # Config 3: raw=False, dropout=0.5, training=True -> Linear + ReLU + Dropout
    p = 0.5
    y_drop = fully_connected_block(x, weight, bias, raw=False, dropout_p=p,
                                   training=True, seed=123)
    jax.block_until_ready(y_drop)
    scaled = ref_relu / (1.0 - p)
    ok = jnp.logical_or(jnp.isclose(y_drop, 0.0, atol=1e-6),
                        jnp.isclose(y_drop, scaled, atol=1e-5, rtol=1e-5))
    assert bool(jnp.all(ok))
    active = ref_relu > 1e-4
    dropped = jnp.logical_and(active, jnp.isclose(y_drop, 0.0, atol=1e-6))
    kept = jnp.logical_and(active, y_drop > 1e-6)
    assert bool(jnp.any(dropped)) and bool(jnp.any(kept))

    # Config 4: eval-mode dropout is identity
    y_eval = fully_connected_block(x, weight, bias, raw=False, dropout_p=p,
                                   training=False)
    jax.block_until_ready(y_eval)
    assert jnp.allclose(y_eval, ref_relu, atol=1e-5, rtol=1e-5)

    print("KERNEL_OK")
</pallas_src>

<mosaic_0001>
module attributes {stable_mosaic.version = 11 : i64} {
  func.func @_fc_kernel_full_k(%arg0: i32, %arg1: i32, %arg2: memref<8x128xf32, #tpu.memory_space<vmem>>, %arg3: memref<128x128xf32, #tpu.memory_space<vmem>>, %arg4: memref<1x128xf32, #tpu.memory_space<vmem>>, %arg5: memref<8x128xf32, #tpu.memory_space<vmem>>) attributes {dimension_semantics = [#tpu.dimension_semantics<parallel>, #tpu.dimension_semantics<parallel>], iteration_bounds = array<i64: 1, 1>, scalar_prefetch = 0 : i64, scratch_operands = 0 : i64, tpu.core_type = #tpu.core_type<tc>, window_params = [{transform_indices = @transform_0, window_bounds = array<i64: 8, 128>}, {transform_indices = @transform_1, window_bounds = array<i64: 128, 128>}, {transform_indices = @transform_2, window_bounds = array<i64: 1, 128>}, {transform_indices = @transform_3, window_bounds = array<i64: 8, 128>}]} {
    %c0 = arith.constant 0 : index
    %c0_0 = arith.constant 0 : index
    %0 = vector.load %arg2[%c0, %c0_0] : memref<8x128xf32, #tpu.memory_space<vmem>>, vector<8x128xf32>
    %c0_1 = arith.constant 0 : index
    %c0_2 = arith.constant 0 : index
    %1 = vector.load %arg3[%c0_1, %c0_2] : memref<128x128xf32, #tpu.memory_space<vmem>>, vector<128x128xf32>
    %cst = arith.constant dense<0.000000e+00> : vector<8x128xf32>
    %2 = tpu.matmul %0, %1, %cst {dimension_numbers = #tpu.dot_dimension_numbers<[1], [0], [0], [1], [0, 0, 1, 1], [], []>} : vector<8x128xf32>, vector<128x128xf32>, vector<8x128xf32> -> vector<8x128xf32>
    %c0_3 = arith.constant 0 : index
    %c0_4 = arith.constant 0 : index
    %3 = vector.load %arg4[%c0_3, %c0_4] : memref<1x128xf32, #tpu.memory_space<vmem>>, vector<1x128xf32>
    %4 = vector.broadcast %3 : vector<1x128xf32> to vector<8x128xf32>
    %5 = arith.addf %2, %4 : vector<8x128xf32>
    %c0_5 = arith.constant 0 : index
    %c0_6 = arith.constant 0 : index
    %6 = vector.load %arg5[%c0_5, %c0_6] : memref<8x128xf32, #tpu.memory_space<vmem>>, vector<8x128xf32>
    tpu.vector_store %arg5[%c0_5, %c0_6], %5 {strides = array<i32>} : memref<8x128xf32, #tpu.memory_space<vmem>>, vector<8x128xf32>,
    return
  }
  func.func @transform_0(%arg0: i32, %arg1: i32) -> (i32, i32) {
    %c0_i32 = arith.constant 0 : i32
    %c0_i32_0 = arith.constant 0 : i32
    return %arg1, %c0_i32 : i32, i32
  }
  func.func @transform_1(%arg0: i32, %arg1: i32) -> (i32, i32) {
    %c0_i32 = arith.constant 0 : i32
    %c0_i32_0 = arith.constant 0 : i32
    return %c0_i32, %arg0 : i32, i32
  }
  func.func @transform_2(%arg0: i32, %arg1: i32) -> (i32, i32) {
    %c0_i32 = arith.constant 0 : i32
    %c0_i32_0 = arith.constant 0 : i32
    return %c0_i32, %arg0 : i32, i32
  }
  func.func @transform_3(%arg0: i32, %arg1: i32) -> (i32, i32) {
    %c0_i32 = arith.constant 0 : i32
    return %arg1, %arg0 : i32, i32
  }
}

</mosaic_0001>

<llo_original>
// kernel: tpu_custom_call.1
$region0: #{tpu_custom_call.1}
  #allocation0 [shape = 'u32[]', space=smem, size = 0x4, offset = 0x4, fixed_abs, tag = 'smem constant byte address 0x4 - core index']
  #allocation1 [shape = 'u32[144,128]{1,0:T(1,128)}', space=vmem, size = 0x12000, scoped, tag = 'internal scratch']
  %s0 = inlined_call_operand.hbm [shape: f32[8,128], index: 0, kind: input, shape index: {}]
  %s1 = inlined_call_operand.hbm [shape: f32[128,128], index: 1, kind: input, shape index: {}]
  %s2 = inlined_call_operand.vmem [shape: f32[1,128], index: 2, kind: input, shape index: {}]
  %s3 = inlined_call_operand.hbm [shape: f32[8,128], index: 3, kind: output, shape index: {}]
  %s4 = sld [smem:[#allocation0]]
  $region30: #{tpu_custom_call.1} parent=0
    _
  %s6 = ssub.s32 1, %s4
  %s7 = scalar_select 0, %s6, %s4
  $region1: #{tpu_custom_call.1} parent=0
    #allocation2 [shape = 'u8[4096]{0}', space=vmem, size = 0x1000, scoped, tag = 'input window, operand 0, single buffered']
    #allocation3 [shape = 's32[1]{0}', space=sflag, size = 0x4, scoped, tag = 'scoped memory for tpu_custom_call.1']
    #allocation4 [shape = 's32[1]{0}', space=sflag, size = 0x4, scoped, tag = 'scoped memory for tpu_custom_call.1']
    #allocation5 [shape = 'u8[65536]{0}', space=vmem, size = 0x10000, scoped, tag = 'input window, operand 1, single buffered']
    #allocation6 [shape = 's32[1]{0}', space=sflag, size = 0x4, scoped, tag = 'scoped memory for tpu_custom_call.1']
    #allocation7 [shape = 'u8[4096]{0}', space=vmem, size = 0x1000, scoped, tag = 'output window, operand 0, single buffered']
    %8 = vsyncpa [#allocation3], 0
    %9 = vsyncpa [#allocation6], 0
    %10 = vsyncpa [#allocation4], 0
    // Predicated region
    $region2: #{tpu_custom_call.1} parent=1 // pred_check
      _
    $region3: #{tpu_custom_call.1} parent=1 // pred_check_branch
      %12 = sbr.rel (0) target = $region5
    $region4: #{tpu_custom_call.1} parent=1 // pred_region
      %s14 = ssub.s32 128, 128
      %15 = vsyncadd [#allocation3], %s14
      %s17 = sshll.u32 [#allocation2], 4
      %s18 = int_to_ptr.vmem [resolvable:$true] %s17
      %20 = dma.hbm_to_vmem [thread:$0]  %s0, 128, %s18, [#allocation3]
    $region5: #{tpu_custom_call.1} parent=1 // pred_fallthru
      _
    // Predicated region
    $region6: #{tpu_custom_call.1} parent=1 // pred_check
      _
    $region7: #{tpu_custom_call.1} parent=1 // pred_check_branch
      %22 = sbr.rel (0) target = $region9
    $region8: #{tpu_custom_call.1} parent=1 // pred_region
      %s24 = ssub.s32 2048, 2048
      %25 = vsyncadd [#allocation6], %s24
      %s26 = sshll.u32 [#allocation5], 4
      %s27 = int_to_ptr.vmem [resolvable:$true] %s26
      %32 = dma.hbm_to_vmem [thread:$0]  %s1, 2048, %s27, [#allocation6], 128, 128, 8
    $region9: #{tpu_custom_call.1} parent=1 // pred_fallthru
      _
    // Predicated region
    $region10: #{tpu_custom_call.1} parent=1 // pred_check
      _
    $region11: #{tpu_custom_call.1} parent=1 // pred_check_branch
      %34 = sbr.rel (0) target = $region13
    $region12: #{tpu_custom_call.1} parent=1 // pred_region
      _
    $region13: #{tpu_custom_call.1} parent=1 // pred_fallthru
      _
    // Predicated region
    $region14: #{tpu_custom_call.1} parent=1 // pred_check
      _
    $region15: #{tpu_custom_call.1} parent=1 // pred_check_branch
      %36 = sbr.rel (0) target = $region17
    $region16: #{tpu_custom_call.1} parent=1 // pred_region
      %37 = dma.done [#allocation3], 128
    $region17: #{tpu_custom_call.1} parent=1 // pred_fallthru
      _
    // Predicated region
    $region18: #{tpu_custom_call.1} parent=1 // pred_check
      _
    $region19: #{tpu_custom_call.1} parent=1 // pred_check_branch
      %39 = sbr.rel (0) target = $region21
    $region20: #{tpu_custom_call.1} parent=1 // pred_region
      %40 = dma.done [#allocation6], 2048
    $region21: #{tpu_custom_call.1} parent=1 // pred_fallthru
      _
    %v41 = vld [vmem:[#allocation2] sm:$0xff]
    %v42 = vld [vmem:[#allocation5] sm:$0xff]
    %v43 = vld [vmem:[#allocation5 + $0x8] sm:$0xff]
    %v44 = vld [vmem:[#allocation5 + $0x10] sm:$0xff]
    %v45 = vld [vmem:[#allocation5 + $0x18] sm:$0xff]
    %v46 = vld [vmem:[#allocation5 + $0x20] sm:$0xff]
    %v47 = vld [vmem:[#allocation5 + $0x28] sm:$0xff]
    %v48 = vld [vmem:[#allocation5 + $0x30] sm:$0xff]
    %v49 = vld [vmem:[#allocation5 + $0x38] sm:$0xff]
    %v50 = vld [vmem:[#allocation5 + $0x40] sm:$0xff]
    %v51 = vld [vmem:[#allocation5 + $0x48] sm:$0xff]
    %v52 = vld [vmem:[#allocation5 + $0x50] sm:$0xff]
    %v53 = vld [vmem:[#allocation5 + $0x58] sm:$0xff]
    %v54 = vld [vmem:[#allocation5 + $0x60] sm:$0xff]
    %v55 = vld [vmem:[#allocation5 + $0x68] sm:$0xff]
    %v56 = vld [vmem:[#allocation5 + $0x70] sm:$0xff]
    %v57 = vld [vmem:[#allocation5 + $0x78] sm:$0xff]
    %v58 = vld [vmem:[%s2] sm:$0x1]
    %v60 = vlaneseq
    %v61 = vshrl.u32 %v60, 7
    %v62 = vsub.s32 0, %v61
    %v63 = vrot.slane %v58, %v62
    %65 = vmatprep.subr.mxu0 0.0
    %66 = vmatpush1.msra.mxu0 %v57
    %67 = vmatprep.subr.mxu0 0.0
    %68 = vmatpush1.msra.mxu0 %v56
    %69 = vmatprep.subr.mxu0 0.0
    %70 = vmatpush1.msra.mxu0 %v55
    %71 = vmatprep.subr.mxu0 0.0
    %72 = vmatpush1.msra.mxu0 %v54
    %73 = vmatprep.subr.mxu0 0.0
    %74 = vmatpush1.msra.mxu0 %v53
    %75 = vmatprep.subr.mxu0 0.0
    %76 = vmatpush1.msra.mxu0 %v52
    %77 = vmatprep.subr.mxu0 0.0
    %78 = vmatpush1.msra.mxu0 %v51
    %79 = vmatprep.subr.mxu0 0.0
    %80 = vmatpush1.msra.mxu0 %v50
    %81 = vmatprep.subr.mxu0 0.0
    %82 = vmatpush1.msra.mxu0 %v49
    %83 = vmatprep.subr.mxu0 0.0
    %84 = vmatpush1.msra.mxu0 %v48
    %85 = vmatprep.subr.mxu0 0.0
    %86 = vmatpush1.msra.mxu0 %v47
    %87 = vmatprep.subr.mxu0 0.0
    %88 = vmatpush1.msra.mxu0 %v46
    %89 = vmatprep.subr.mxu0 0.0
    %90 = vmatpush1.msra.mxu0 %v45
    %91 = vmatprep.subr.mxu0 0.0
    %92 = vmatpush1.msra.mxu0 %v44
    %93 = vmatprep.subr.mxu0 0.0
    %94 = vmatpush1.msra.mxu0 %v43
    %95 = vmatprep.subr.mxu0 0.0
    %96 = vmatpush1.msra.mxu0 %v42
    %97 = vmatprep.subr.mxu0 0.0
    %98 = vmatpush2.msra.mxu0 0.0
    %99 = vmatprep.subr.mxu0 0.0
    %100 = vmatpush2.msra.mxu0 0.0
    %101 = vmatprep.subr.mxu0 0.0
    %102 = vmatpush2.msra.mxu0 0.0
    %103 = vmatprep.subr.mxu0 0.0
    %104 = vmatpush2.msra.mxu0 0.0
    %105 = vmatprep.subr.mxu0 0.0
    %106 = vmatpush2.msra.mxu0 0.0
    %107 = vmatprep.subr.mxu0 0.0
    %108 = vmatpush2.msra.mxu0 0.0
    %109 = vmatprep.subr.mxu0 0.0
    %110 = vmatpush2.msra.mxu0 0.0
    %111 = vmatprep.subr.mxu0 0.0
    %112 = vmatpush2.msra.mxu0 0.0
    %113 = vmatprep.subr.mxu0 0.0
    %114 = vmatpush2.msra.mxu0 0.0
    %115 = vmatprep.subr.mxu0 0.0
    %116 = vmatpush2.msra.mxu0 0.0
    %117 = vmatprep.subr.mxu0 0.0
    %118 = vmatpush2.msra.mxu0 0.0
    %119 = vmatprep.subr.mxu0 0.0
    %120 = vmatpush2.msra.mxu0 0.0
    %121 = vmatprep.subr.mxu0 0.0
    %122 = vmatpush2.msra.mxu0 0.0
    %123 = vmatprep.subr.mxu0 0.0
    %124 = vmatpush2.msra.mxu0 0.0
    %125 = vmatprep.subr.mxu0 0.0
    %126 = vmatpush2.msra.mxu0 0.0
    %127 = vmatprep.subr.mxu0 0.0
    %128 = vmatpush2.msra.mxu0 0.0
    %129 = vmatprep.mubr.f32.mxu0 0.0
    %130 = vmatmul.mubr.f32.gmra.mxu0 %v41
    %v131 = vpop.f32.mrf.mxu0
    %v132 = vadd.f32 %v63, %v131
    %v133 = vpop.f32.mrf.mxu0
    %134 = vdwg.mxu0
    %135 = vst [vmem:[#allocation7] sm:$0xff] %v132
    // Predicated region
    $region22: #{tpu_custom_call.1} parent=1 // pred_check
      _
    $region23: #{tpu_custom_call.1} parent=1 // pred_check_branch
      %137 = sbr.rel (0) target = $region25
    $region24: #{tpu_custom_call.1} parent=1 // pred_region
      %s139 = ssub.s32 128, 128
      %140 = vsyncadd [#allocation4], %s139
      %s142 = sshll.u32 [#allocation7], 4
      %s143 = int_to_ptr.vmem [resolvable:$true] %s142
      %145 = dma.vmem_to_hbm [thread:$0]  %s143, 128, %s3, [#allocation4]
    $region25: #{tpu_custom_call.1} parent=1 // pred_fallthru
      _
    // Predicated region
    $region26: #{tpu_custom_call.1} parent=1 // pred_check
      _
    $region27: #{tpu_custom_call.1} parent=1 // pred_check_branch
      %147 = sbr.rel (0) target = $region29
    $region28: #{tpu_custom_call.1} parent=1 // pred_region
      %148 = dma.done [#allocation4], 128
    $region29: #{tpu_custom_call.1} parent=1 // pred_fallthru
      _
    %149 = vsyncpa [#allocation3], 1
    %150 = vsyncpa [#allocation6], 1
    %151 = vsyncpa [#allocation4], 1

</llo_original>
